<compile_context>
chip_gen: v5e
topology: v5e:2x2
jax: 0.10.0
libtpu: 0.0.40
codegen_flags: <defaults>
</compile_context>

<pallas_src>
import functools

import jax
import jax.numpy as jnp
from jax.experimental import pallas as pl
from jax.experimental.pallas import tpu as pltpu

EPS = 1e-5
_TARGET_BLOCK_BYTES = 4 * 1024 * 1024       # per-block DMA target for tiled path
_FUSED_VMEM_BUDGET = 24 * 1024 * 1024       # conservative fused-path threshold
_VMEM_LIMIT = 32 * 1024 * 1024


def _cdiv(a, b):
    return (a + b - 1) // b


# ----------------------------------------------------------------------------
# Fused single-call path: whole slab resident in VMEM, 1 read + 1 write.
# ----------------------------------------------------------------------------
def _fused_kernel(x_ref, g_ref, b_ref, o_ref, *, n_rows, eps):
    x = x_ref[...].astype(jnp.float32)
    inv_n = 1.0 / n_rows
    mean = jnp.sum(x, axis=0, keepdims=True) * inv_n
    d = x - mean
    var = jnp.sum(d * d, axis=0, keepdims=True) * inv_n   # exact two-pass variance
    inv_std = jax.lax.rsqrt(var + eps)
    scale = g_ref[...].astype(jnp.float32) * inv_std
    o_ref[...] = (d * scale + b_ref[...].astype(jnp.float32)).astype(o_ref.dtype)


# ----------------------------------------------------------------------------
# Tiled path, pass 1: partial per-channel sum / sum-of-squares.
# ----------------------------------------------------------------------------
def _partial_stats_kernel(x_ref, psum_ref, psq_ref, *,
                          nr, nr_inner, tr, n_rows, needs_mask):
    s = pl.program_id(0)
    r = pl.program_id(2)

    @pl.when(r == 0)
    def _():
        psum_ref[...] = jnp.zeros_like(psum_ref)
        psq_ref[...] = jnp.zeros_like(psq_ref)

    x = x_ref[...].astype(jnp.float32)
    if needs_mask:
        raw = s * nr_inner + r                      # unclamped row-block index
        row = jax.lax.broadcasted_iota(jnp.int32, x.shape, 0) + raw * tr
        valid = (raw < nr) & (row < n_rows)
        x = jnp.where(valid, x, 0.0)
    psum_ref[...] += jnp.sum(x, axis=0, keepdims=True)
    psq_ref[...] += jnp.sum(x * x, axis=0, keepdims=True)


# ----------------------------------------------------------------------------
# Tiled path, pass 2: pure streaming normalize.
# ----------------------------------------------------------------------------
def _norm_kernel(x_ref, scale_ref, shift_ref, o_ref):
    x = x_ref[...].astype(jnp.float32)
    o_ref[...] = (x * scale_ref[...] + shift_ref[...]).astype(o_ref.dtype)


def transpose_batch_norm(x, gamma, beta, eps=EPS, *,
                         force_two_pass=False, row_tile=None):
    """x: (B, L, C). gamma, beta: (C,). Returns BatchNorm1d(C)-normalized x."""
    B, L, C = x.shape
    N = B * L
    itemsize = x.dtype.itemsize
    x2 = x.reshape(N, C)                                  # zero-copy view
    g2 = gamma.astype(jnp.float32).reshape(1, C)
    b2 = beta.astype(jnp.float32).reshape(1, C)

    # ---------- fused fast path: slab (+ f32 temps, double buffers) fits VMEM ----
    fused_vmem_estimate = N * C * (4 * itemsize + 12)
    if (not force_two_pass) and fused_vmem_estimate <= _FUSED_VMEM_BUDGET:
        out2 = pl.pallas_call(
            functools.partial(_fused_kernel, n_rows=N, eps=eps),
            out_shape=jax.ShapeDtypeStruct((N, C), x.dtype),
            grid_spec=pltpu.PrefetchScalarGridSpec(
                num_scalar_prefetch=0,
                grid=(1,),
                in_specs=[pl.BlockSpec((N, C), lambda i: (0, 0)),
                          pl.BlockSpec((1, C), lambda i: (0, 0)),
                          pl.BlockSpec((1, C), lambda i: (0, 0))],
                out_specs=pl.BlockSpec((N, C), lambda i: (0, 0)),
            ),
            compiler_params=pltpu.CompilerParams(
                dimension_semantics=("arbitrary",),
                vmem_limit_bytes=_VMEM_LIMIT),
        )(x2, g2, b2)
        return out2.reshape(B, L, C)

    # ---------- tile selection (no over-padding; cdiv grids) ----------
    if C <= 1024:
        TC, nc = C, 1                 # full channel dim -> always layout-legal
    else:
        TC = 512                      # multiple of 128; trailing block clipped
        nc = _cdiv(C, TC)

    if row_tile is not None:
        TR = int(row_tile)            # testing hook; must be a multiple of 8
        nr = _cdiv(N, TR)
    else:
        tr = _TARGET_BLOCK_BYTES // (TC * itemsize)
        tr = max(256, min(2048, (tr // 256) * 256))   # multiple of 256: any dtype
        if N <= tr:
            TR, nr = N, 1             # full row dim -> always layout-legal
        else:
            TR, nr = tr, _cdiv(N, tr)

    # Row-split so the stats sweep uses both v7x TensorCores even when nc == 1.
    n_splits = 2 if nr >= 2 else 1
    nr_inner = _cdiv(nr, n_splits)
    overshoot = n_splits * nr_inner > nr
    needs_mask = overshoot or (N % TR != 0)

    def x_index(s, c, r):
        idx = s * nr_inner + r
        if overshoot:
            idx = jnp.minimum(idx, nr - 1)            # keep DMA in bounds
        return (idx, c)

    # ---------- pass 1: partial per-channel sums ----------
    psum, psq = pl.pallas_call(
        functools.partial(_partial_stats_kernel, nr=nr, nr_inner=nr_inner,
                          tr=TR, n_rows=N, needs_mask=needs_mask),
        out_shape=(jax.ShapeDtypeStruct((n_splits, C), jnp.float32),
                   jax.ShapeDtypeStruct((n_splits, C), jnp.float32)),
        grid_spec=pltpu.PrefetchScalarGridSpec(
            num_scalar_prefetch=0,
            grid=(n_splits, nc, nr_inner),
            in_specs=[pl.BlockSpec((TR, TC), x_index)],
            out_specs=(pl.BlockSpec((1, TC), lambda s, c, r: (s, c)),
                       pl.BlockSpec((1, TC), lambda s, c, r: (s, c))),
        ),
        compiler_params=pltpu.CompilerParams(
            dimension_semantics=("parallel", "parallel", "arbitrary"),
            vmem_limit_bytes=_VMEM_LIMIT),
    )(x2)

    # ---------- finalize scale/shift in plain JAX ((C,)-sized, negligible) ----
    # NOTE: E[x^2]-E[x]^2 variance in f32; documented tolerance vs two-pass.
    total = jnp.sum(psum, axis=0)
    total_sq = jnp.sum(psq, axis=0)
    mean = total * (1.0 / N)
    var = jnp.maximum(total_sq * (1.0 / N) - mean * mean, 0.0)
    inv_std = jax.lax.rsqrt(var + eps)
    scale = gamma.astype(jnp.float32) * inv_std
    shift = beta.astype(jnp.float32) - mean * scale
    scale = scale.reshape(1, C)
    shift = shift.reshape(1, C)

    # ---------- pass 2: streaming normalize ----------
    out2 = pl.pallas_call(
        _norm_kernel,
        out_shape=jax.ShapeDtypeStruct((N, C), x.dtype),
        grid_spec=pltpu.PrefetchScalarGridSpec(
            num_scalar_prefetch=0,
            grid=(nc, nr),
            in_specs=[pl.BlockSpec((TR, TC), lambda c, r: (r, c)),
                      pl.BlockSpec((1, TC), lambda c, r: (0, c)),
                      pl.BlockSpec((1, TC), lambda c, r: (0, c))],
            out_specs=pl.BlockSpec((TR, TC), lambda c, r: (r, c)),
        ),
        compiler_params=pltpu.CompilerParams(
            dimension_semantics=("parallel", "parallel"),
            vmem_limit_bytes=_VMEM_LIMIT),
    )(x2, scale, shift)

    return out2.reshape(B, L, C)


def _reference(x, gamma, beta):
    # Pure-JAX reference mirroring PyTorch BatchNorm1d (training forward).
    mean = jnp.mean(x, axis=(0, 1), keepdims=True)
    var = jnp.mean((x - mean) ** 2, axis=(0, 1), keepdims=True)
    return (x - mean) / jnp.sqrt(var + EPS) * gamma + beta


if __name__ == "__main__":
    key = jax.random.PRNGKey(0)
    kx, kg, kb = jax.random.split(key, 3)

    # Natural small shape of the module: (batch, seq, num_features).
    B, L, C = 2, 8, 32
    x = jax.random.normal(kx, (B, L, C), dtype=jnp.float32)
    gamma = 1.0 + 0.1 * jax.random.normal(kg, (C,), dtype=jnp.float32)
    beta = 0.1 * jax.random.normal(kb, (C,), dtype=jnp.float32)

    out = jax.block_until_ready(transpose_batch_norm(x, gamma, beta))
    ref = _reference(x, gamma, beta)
    assert out.shape == (B, L, C)
    assert jnp.max(jnp.abs(out - ref)) < 1e-4

    # Exercise the tiled two-pass path (cdiv grid, boundary row masking,
    # row-split stats, clipped trailing writes) at a non-aligned shape.
    B2, L2, C2 = 2, 200, 96
    x_t = jax.random.normal(kx, (B2, L2, C2), dtype=jnp.float32)
    g_t = 1.0 + 0.1 * jax.random.normal(kg, (C2,), dtype=jnp.float32)
    b_t = 0.1 * jax.random.normal(kb, (C2,), dtype=jnp.float32)
    out_t = jax.block_until_ready(
        transpose_batch_norm(x_t, g_t, b_t, force_two_pass=True, row_tile=64))
    ref_t = _reference(x_t, g_t, b_t)
    assert out_t.shape == (B2, L2, C2)
    assert jnp.max(jnp.abs(out_t - ref_t)) < 1e-4

    print("KERNEL_OK")
</pallas_src>

<mosaic_0001>
module attributes {stable_mosaic.version = 11 : i64} {
  func.func @_fused_kernel(%arg0: i32, %arg1: memref<16x32xf32, #tpu.memory_space<vmem>>, %arg2: memref<1x32xf32, #tpu.memory_space<vmem>>, %arg3: memref<1x32xf32, #tpu.memory_space<vmem>>, %arg4: memref<16x32xf32, #tpu.memory_space<vmem>>) attributes {dimension_semantics = [#tpu.dimension_semantics<arbitrary>], iteration_bounds = array<i64: 1>, scalar_prefetch = 0 : i64, scratch_operands = 0 : i64, tpu.core_type = #tpu.core_type<tc>, window_params = [{pipeline_mode = #tpu.pipeline_mode<synchronous>, transform_indices = @transform_0, window_bounds = array<i64: 16, 32>}, {pipeline_mode = #tpu.pipeline_mode<synchronous>, transform_indices = @transform_1, window_bounds = array<i64: 1, 32>}, {pipeline_mode = #tpu.pipeline_mode<synchronous>, transform_indices = @transform_2, window_bounds = array<i64: 1, 32>}, {pipeline_mode = #tpu.pipeline_mode<synchronous>, transform_indices = @transform_3, window_bounds = array<i64: 16, 32>}]} {
    %c0 = arith.constant 0 : index
    %c0_0 = arith.constant 0 : index
    %0 = vector.load %arg1[%c0, %c0_0] : memref<16x32xf32, #tpu.memory_space<vmem>>, vector<16x32xf32>
    %cst = arith.constant dense<0.000000e+00> : vector<32xf32>
    %1 = vector.multi_reduction <add>, %0, %cst [0] : vector<16x32xf32> to vector<32xf32>
    %2 = vector.shape_cast %1 : vector<32xf32> to vector<1x32xf32>
    %cst_1 = arith.constant 6.250000e-02 : f32
    %3 = vector.broadcast %cst_1 : f32 to vector<1x32xf32>
    %4 = arith.mulf %2, %3 : vector<1x32xf32>
    %5 = vector.broadcast %4 : vector<1x32xf32> to vector<16x32xf32>
    %6 = arith.subf %0, %5 : vector<16x32xf32>
    %7 = arith.mulf %6, %6 : vector<16x32xf32>
    %cst_2 = arith.constant dense<0.000000e+00> : vector<32xf32>
    %8 = vector.multi_reduction <add>, %7, %cst_2 [0] : vector<16x32xf32> to vector<32xf32>
    %9 = vector.shape_cast %8 : vector<32xf32> to vector<1x32xf32>
    %cst_3 = arith.constant 6.250000e-02 : f32
    %10 = vector.broadcast %cst_3 : f32 to vector<1x32xf32>
    %11 = arith.mulf %9, %10 : vector<1x32xf32>
    %cst_4 = arith.constant 9.99999974E-6 : f32
    %12 = vector.broadcast %cst_4 : f32 to vector<1x32xf32>
    %13 = arith.addf %11, %12 : vector<1x32xf32>
    %14 = math.rsqrt %13 : vector<1x32xf32>
    %c0_5 = arith.constant 0 : index
    %c0_6 = arith.constant 0 : index
    %15 = vector.load %arg2[%c0_5, %c0_6] : memref<1x32xf32, #tpu.memory_space<vmem>>, vector<1x32xf32>
    %16 = arith.mulf %15, %14 : vector<1x32xf32>
    %17 = vector.broadcast %16 : vector<1x32xf32> to vector<16x32xf32>
    %18 = arith.mulf %6, %17 : vector<16x32xf32>
    %c0_7 = arith.constant 0 : index
    %c0_8 = arith.constant 0 : index
    %19 = vector.load %arg3[%c0_7, %c0_8] : memref<1x32xf32, #tpu.memory_space<vmem>>, vector<1x32xf32>
    %20 = vector.broadcast %19 : vector<1x32xf32> to vector<16x32xf32>
    %21 = arith.addf %18, %20 : vector<16x32xf32>
    %c0_9 = arith.constant 0 : index
    %c0_10 = arith.constant 0 : index
    %22 = vector.load %arg4[%c0_9, %c0_10] : memref<16x32xf32, #tpu.memory_space<vmem>>, vector<16x32xf32>
    tpu.vector_store %arg4[%c0_9, %c0_10], %21 {strides = array<i32>} : memref<16x32xf32, #tpu.memory_space<vmem>>, vector<16x32xf32>,
    return
  }
  func.func @transform_0(%arg0: i32) -> (i32, i32) {
    %c0_i32 = arith.constant 0 : i32
    %c0_i32_0 = arith.constant 0 : i32
    %c0_i32_1 = arith.constant 0 : i32
    return %c0_i32, %c0_i32_0 : i32, i32
  }
  func.func @transform_1(%arg0: i32) -> (i32, i32) {
    %c0_i32 = arith.constant 0 : i32
    %c0_i32_0 = arith.constant 0 : i32
    %c0_i32_1 = arith.constant 0 : i32
    return %c0_i32, %c0_i32_0 : i32, i32
  }
  func.func @transform_2(%arg0: i32) -> (i32, i32) {
    %c0_i32 = arith.constant 0 : i32
    %c0_i32_0 = arith.constant 0 : i32
    %c0_i32_1 = arith.constant 0 : i32
    return %c0_i32, %c0_i32_0 : i32, i32
  }
  func.func @transform_3(%arg0: i32) -> (i32, i32) {
    %c0_i32 = arith.constant 0 : i32
    %c0_i32_0 = arith.constant 0 : i32
    %c0_i32_1 = arith.constant 0 : i32
    return %c0_i32, %c0_i32_0 : i32, i32
  }
}

</mosaic_0001>

<llo_original>
// kernel: tpu_custom_call.1
$region0: #{tpu_custom_call.1}
  #allocation0 [shape = 'u32[]', space=smem, size = 0x4, offset = 0x4, fixed_abs, tag = 'smem constant byte address 0x4 - core index']
  #allocation1 [shape = 'u32[72,128]{1,0:T(1,128)}', space=vmem, size = 0x9000, scoped, tag = 'internal scratch']
  %s0 = inlined_call_operand.hbm [shape: f32[16,32], index: 0, kind: input, shape index: {}]
  %s1 = inlined_call_operand.hbm [shape: f32[1,32], index: 1, kind: input, shape index: {}]
  %s2 = inlined_call_operand.vmem [shape: f32[1,32], index: 2, kind: input, shape index: {}]
  %s3 = inlined_call_operand.hbm [shape: f32[16,32], index: 3, kind: output, shape index: {}]
  %s4 = sld [smem:[#allocation0]]
  $region30: #{tpu_custom_call.1} parent=0
    _
  %s6 = ssub.s32 1, %s4
  %s7 = scalar_select 0, %s6, %s4
  $region1: #{tpu_custom_call.1} parent=0
    #allocation2 [shape = 'u8[8192]{0}', space=vmem, size = 0x2000, scoped, tag = 'input window, operand 0, single buffered']
    #allocation3 [shape = 's32[1]{0}', space=sflag, size = 0x4, scoped, tag = 'scoped memory for tpu_custom_call.1']
    #allocation4 [shape = 's32[1]{0}', space=sflag, size = 0x4, scoped, tag = 'scoped memory for tpu_custom_call.1']
    #allocation5 [shape = 'u8[512]{0}', space=vmem, size = 0x400, scoped, tag = 'input window, operand 1, single buffered']
    #allocation6 [shape = 's32[1]{0}', space=sflag, size = 0x4, scoped, tag = 'scoped memory for tpu_custom_call.1']
    #allocation7 [shape = 'u8[8192]{0}', space=vmem, size = 0x2000, scoped, tag = 'output window, operand 0, single buffered']
    %8 = vsyncpa [#allocation3], 0
    %9 = vsyncpa [#allocation6], 0
    %10 = vsyncpa [#allocation4], 0
    // Predicated region
    $region2: #{tpu_custom_call.1} parent=1 // pred_check
      _
    $region3: #{tpu_custom_call.1} parent=1 // pred_check_branch
      %12 = sbr.rel (0) target = $region5
    $region4: #{tpu_custom_call.1} parent=1 // pred_region
      %14 = vsyncadd [#allocation3], 0
      %s15 = sshll.u32 %s0, 4
      %s16 = int_to_ptr.hbm [resolvable:$true] %s15
      %s17 = sshll.u32 [#allocation2], 4
      %s18 = int_to_ptr.vmem [resolvable:$true] %s17
      %23 = dma.hbm_to_vmem [thread:$0]  %s16, 256, %s18, [#allocation3], 128, 128, 8
    $region5: #{tpu_custom_call.1} parent=1 // pred_fallthru
      _
    // Predicated region
    $region6: #{tpu_custom_call.1} parent=1 // pred_check
      _
    $region7: #{tpu_custom_call.1} parent=1 // pred_check_branch
      %25 = sbr.rel (0) target = $region9
    $region8: #{tpu_custom_call.1} parent=1 // pred_region
      %27 = vsyncadd [#allocation6], 0
      %s29 = sshll.u32 %s1, 4
      %s30 = int_to_ptr.hbm [resolvable:$true] %s29
      %s31 = sshll.u32 [#allocation5], 4
      %s32 = int_to_ptr.vmem [resolvable:$true] %s31
      %34 = dma.hbm_to_vmem [thread:$0]  %s30, 16, %s32, [#allocation6]
    $region9: #{tpu_custom_call.1} parent=1 // pred_fallthru
      _
    // Predicated region
    $region10: #{tpu_custom_call.1} parent=1 // pred_check
      _
    $region11: #{tpu_custom_call.1} parent=1 // pred_check_branch
      %36 = sbr.rel (0) target = $region13
    $region12: #{tpu_custom_call.1} parent=1 // pred_region
      _
    $region13: #{tpu_custom_call.1} parent=1 // pred_fallthru
      _
    // Predicated region
    $region14: #{tpu_custom_call.1} parent=1 // pred_check
      _
    $region15: #{tpu_custom_call.1} parent=1 // pred_check_branch
      %38 = sbr.rel (0) target = $region17
    $region16: #{tpu_custom_call.1} parent=1 // pred_region
      %40 = dma.done [#allocation3], 256
    $region17: #{tpu_custom_call.1} parent=1 // pred_fallthru
      _
    // Predicated region
    $region18: #{tpu_custom_call.1} parent=1 // pred_check
      _
    $region19: #{tpu_custom_call.1} parent=1 // pred_check_branch
      %42 = sbr.rel (0) target = $region21
    $region20: #{tpu_custom_call.1} parent=1 // pred_region
      %44 = dma.done [#allocation6], 16
    $region21: #{tpu_custom_call.1} parent=1 // pred_fallthru
      _
    %v45 = vld [vmem:[#allocation2] sm:$0xff]
    %v46 = vld [vmem:[#allocation2 + $0x8] sm:$0xff]
    %vm47 = vcmask 261120
    %v48 = vsel %vm47, %v45, 0.0
    %v49 = vsel %vm47, %v46, 0.0
    %v50 = vadd.f32 %v48, %v49
    %v51 = vrot.slane %v50, 4
    %v52 = vadd.f32 %v50, %v51
    %v53 = vrot.slane %v52, 2
    %v54 = vadd.f32 %v52, %v53
    %v55 = vrot.slane %v54, 1
    %v56 = vadd.f32 %v54, %v55
    %v57 = vmul.f32 %v56, 0.0625
    %v58 = vsub.f32 %v45, %v57
    %v59 = vsub.f32 %v46, %v57
    %v60 = vmul.f32 %v58, %v58
    %v61 = vmul.f32 %v59, %v59
    %v62 = vsel %vm47, %v60, 0.0
    %v63 = vsel %vm47, %v61, 0.0
    %v64 = vadd.f32 %v62, %v63
    %v65 = vrot.slane %v64, 4
    %v66 = vadd.f32 %v64, %v65
    %v67 = vrot.slane %v66, 2
    %v68 = vadd.f32 %v66, %v67
    %v69 = vrot.slane %v68, 1
    %v70 = vadd.f32 %v68, %v69
    %v71 = vmul.f32 %v70, 0.0625
    %v72 = vadd.f32 %v71, 1e-05
    %v73 = vrsqrt.pop %v72
    %v74 = vmul.f32 %v73, %v72
    %v75 = vmul.f32 %v74, %v73
    %v76 = vmul.f32 0.5, %v75
    %v77 = vsub.f32 1.5, %v76
    %v78 = vmul.f32 %v73, %v77
    %vm79 = vweird.f32 %v72
    %vm80 = vweird.f32 %v73
    %vm81 = vmor %vm79, %vm80
    %v82 = vsel %vm81, %v73, %v78
    %v83 = vld [vmem:[#allocation5] sm:$0x1]
    %v84 = vmul.f32 %v83, %v82
    %v86 = vperm.slane %v84, 0
    %v88 = vmul.f32 %v58, %v86
    %v89 = vmul.f32 %v59, %v86
    %v90 = vld [vmem:[%s2] sm:$0x1]
    %v92 = vperm.slane %v90, 0
    %v94 = vadd.f32 %v88, %v92
    %v95 = vadd.f32 %v89, %v92
    %96 = vst.msk [vmem:[#allocation7] sm:$0xff] %vm47, %v94
    %97 = vst.msk [vmem:[#allocation7 + $0x8] sm:$0xff] %vm47, %v95
    // Predicated region
    $region22: #{tpu_custom_call.1} parent=1 // pred_check
      _
    $region23: #{tpu_custom_call.1} parent=1 // pred_check_branch
      %99 = sbr.rel (0) target = $region25
    $region24: #{tpu_custom_call.1} parent=1 // pred_region
      %101 = vsyncadd [#allocation4], 0
      %s102 = sshll.u32 [#allocation7], 4
      %s103 = int_to_ptr.vmem [resolvable:$true] %s102
      %s104 = sshll.u32 %s3, 4
      %s105 = int_to_ptr.hbm [resolvable:$true] %s104
      %110 = dma.vmem_to_hbm [thread:$0]  %s103, 256, %s105, [#allocation4], 128, 128, 8
    $region25: #{tpu_custom_call.1} parent=1 // pred_fallthru
      _
    // Predicated region
    $region26: #{tpu_custom_call.1} parent=1 // pred_check
      _
    $region27: #{tpu_custom_call.1} parent=1 // pred_check_branch
      %112 = sbr.rel (0) target = $region29
    $region28: #{tpu_custom_call.1} parent=1 // pred_region
      %114 = dma.done [#allocation4], 256
    $region29: #{tpu_custom_call.1} parent=1 // pred_fallthru
      _
    %115 = vsyncpa [#allocation3], 1
    %116 = vsyncpa [#allocation6], 1
    %117 = vsyncpa [#allocation4], 1

</llo_original>
